<compile_context>
chip_gen: v5e
topology: v5e:2x2
jax: 0.10.0
libtpu: 0.0.40
codegen_flags: <defaults>
</compile_context>

<pallas_src>
import functools

import jax
import jax.numpy as jnp
from jax import lax
from jax.experimental import pallas as pl
from jax.experimental.pallas import tpu as pltpu

BN_EPS = 1e-5
BIAS_FINAL_INIT = 0.0003
WEIGHT_FINAL_INIT = 0.003

_LANE = 128
_SUB = 8


def _round_up(n, m):
    return ((n + m - 1) // m) * m


def actor_kernel(x_ref, p_ref, o_ref, *, r_w2, r_w3, r_vec, w_dim):
    """x:[B,F]  p:[R,w_dim] packed params  o:[B,w_dim]  (all VMEM-resident, one grid step)."""
    x = x_ref[...]
    B, f = x.shape
    inv_b = 1.0 / B

    # Static row slices of the single packed parameter slab (free, tile-aligned).
    w1 = p_ref[0:f, :]                         # [F,  W]
    w2 = p_ref[r_w2:r_w2 + w_dim, :]           # [W,  W]
    w3 = p_ref[r_w3:r_w3 + w_dim, :]           # [W,  W]
    g1 = p_ref[r_vec + 0:r_vec + 1, :]         # [1,  W]
    be1 = p_ref[r_vec + 1:r_vec + 2, :]
    g2 = p_ref[r_vec + 2:r_vec + 3, :]
    be2 = p_ref[r_vec + 3:r_vec + 4, :]
    b3 = p_ref[r_vec + 4:r_vec + 5, :]

    def bn_relu(h, g, be):
        # Single-pass batch statistics (biased variance, f32 accumulation).
        mean = jnp.sum(h, axis=0, keepdims=True) * inv_b
        ex2 = jnp.sum(h * h, axis=0, keepdims=True) * inv_b
        var = jnp.maximum(ex2 - mean * mean, 0.0)
        scale = g * lax.rsqrt(var + BN_EPS)           # [1,W]  (0 on padded lanes)
        shift = be - mean * scale                     # [1,W]  (0 on padded lanes)
        return jnp.maximum(h * scale + shift, 0.0)    # one FMA per element + relu

    # layer 1: Linear (bias cancelled by BN) -> BN -> ReLU
    h = jnp.dot(x, w1, preferred_element_type=jnp.float32)
    h = bn_relu(h, g1, be1)

    # layer 2: Linear (bias cancelled by BN) -> BN -> ReLU
    h = jnp.dot(h, w2, preferred_element_type=jnp.float32)
    h = bn_relu(h, g2, be2)

    # output: Linear -> tanh   (padded output lanes are exactly 0: tanh(0) == 0)
    out = jnp.dot(h, w3, preferred_element_type=jnp.float32) + b3
    o_ref[...] = jnp.tanh(out)


def pack_actor_params(params):
    """One-time packing: drop b1/b2, pad everything to 128 lanes, fuse into ONE f32 slab."""
    (w1, b1, g1, be1, w2, b2, g2, be2, w3, b3) = params
    f, h0 = w1.shape
    h1 = w2.shape[1]
    num_outputs = w3.shape[1]

    w_dim = max(_LANE, _round_up(max(h0, h1, num_outputs), _LANE))
    f_pad = _round_up(f, _SUB)
    r_w2 = f_pad
    r_w3 = f_pad + w_dim
    r_vec = f_pad + 2 * w_dim
    n_rows = r_vec + _SUB

    slab = jnp.zeros((n_rows, w_dim), jnp.float32)
    slab = slab.at[0:f, 0:h0].set(w1)
    slab = slab.at[r_w2:r_w2 + h0, 0:h1].set(w2)
    slab = slab.at[r_w3:r_w3 + h1, 0:num_outputs].set(w3)
    slab = slab.at[r_vec + 0, 0:h0].set(jnp.reshape(g1, (-1,)))
    slab = slab.at[r_vec + 1, 0:h0].set(jnp.reshape(be1, (-1,)))
    slab = slab.at[r_vec + 2, 0:h1].set(jnp.reshape(g2, (-1,)))
    slab = slab.at[r_vec + 3, 0:h1].set(jnp.reshape(be2, (-1,)))
    slab = slab.at[r_vec + 4, 0:num_outputs].set(jnp.reshape(b3, (-1,)))
    # b1/b2 deliberately not packed: a per-feature bias is cancelled by BN mean subtraction.

    meta = dict(w_dim=w_dim, r_w2=r_w2, r_w3=r_w3, r_vec=r_vec, num_outputs=num_outputs)
    return slab, meta


def actor_forward(x_stacked, packed):
    """x_stacked: [T, B, F] -> padded actions [T, B, 128] (real actions in lanes [:A]).

    The parameter slab is DMA'd once (constant index_map) and reused across all T grid
    steps; each step costs only the [B,F] input DMA + [B,128] output DMA.
    """
    slab, meta = packed
    T, B, F = x_stacked.shape
    w_dim = meta["w_dim"]

    kernel = functools.partial(
        actor_kernel,
        r_w2=meta["r_w2"], r_w3=meta["r_w3"], r_vec=meta["r_vec"], w_dim=w_dim)

    out_pad = pl.pallas_call(
        kernel,
        out_shape=jax.ShapeDtypeStruct((T, B, w_dim), jnp.float32),
        grid=(T,),
        in_specs=[
            pl.BlockSpec((pl.Squeezed(), B, F), lambda t: (t, 0, 0)),
            pl.BlockSpec(slab.shape, lambda t: (0, 0)),       # constant -> DMA'd once
        ],
        out_specs=pl.BlockSpec((pl.Squeezed(), B, w_dim), lambda t: (t, 0, 0)),
        compiler_params=pltpu.CompilerParams(
            dimension_semantics=("parallel",)),                # 2-TC split on v7x
    )(x_stacked, slab)
    return out_pad


def init_actor_params(key, num_inputs, hidden_size, num_outputs):
    """Deterministic init mirroring the PyTorch module's __init__.
    Linear weights are returned already transposed to [in, out]."""
    h0, h1 = hidden_size
    ks = jax.random.split(key, 6)

    def fan_in_uniform(k, shape, fan_in):
        w = 1.0 / jnp.sqrt(jnp.float32(fan_in))
        return jax.random.uniform(k, shape, jnp.float32, -w, w)

    w1 = fan_in_uniform(ks[0], (num_inputs, h0), num_inputs)
    b1 = fan_in_uniform(ks[1], (1, h0), h0)
    w2 = fan_in_uniform(ks[2], (h0, h1), h0)
    b2 = fan_in_uniform(ks[3], (1, h1), h1)
    w3 = jax.random.uniform(ks[4], (h1, num_outputs), jnp.float32,
                            -WEIGHT_FINAL_INIT, WEIGHT_FINAL_INIT)
    b3 = jax.random.uniform(ks[5], (1, num_outputs), jnp.float32,
                            -BIAS_FINAL_INIT, BIAS_FINAL_INIT)
    g1 = jnp.ones((1, h0), jnp.float32)
    be1 = jnp.zeros((1, h0), jnp.float32)
    g2 = jnp.ones((1, h1), jnp.float32)
    be2 = jnp.zeros((1, h1), jnp.float32)
    return (w1, b1, g1, be1, w2, b2, g2, be2, w3, b3)


def actor_reference(x, params):
    """Pure-JAX reference mirroring the full torch forward (train-mode BN, with biases)."""
    (w1, b1, g1, be1, w2, b2, g2, be2, w3, b3) = params

    def bn(h, g, be):
        m = jnp.mean(h, axis=0, keepdims=True)
        v = jnp.mean((h - m) ** 2, axis=0, keepdims=True)
        return (h - m) / jnp.sqrt(v + BN_EPS) * g + be

    h = jnp.maximum(bn(x @ w1 + b1, g1, be1), 0.0)
    h = jnp.maximum(bn(h @ w2 + b2, g2, be2), 0.0)
    return jnp.tanh(h @ w3 + b3)


if __name__ == "__main__":
    # Shapes consistent with the module: state dim 16, hidden=(32, 32), 4 actions.
    # T independent mini-batches of B states each (rollout-style batched evaluation).
    T = 4
    B = 8
    num_inputs = 16
    hidden_size = (32, 32)
    num_outputs = 4

    key = jax.random.PRNGKey(0)
    kx, kp = jax.random.split(key)
    x = jax.random.normal(kx, (T, B, num_inputs), jnp.float32)
    params = init_actor_params(kp, num_inputs, hidden_size, num_outputs)

    packed = pack_actor_params(params)           # one-time packing (reused across calls)
    packed = (jax.block_until_ready(packed[0]), packed[1])

    out_pad = actor_forward(x, packed)           # [T, B, 128] lane-dense output
    out_pad = jax.block_until_ready(out_pad)

    out = out_pad[..., :num_outputs]             # off the hot path: real action lanes
    ref = jax.vmap(lambda xb: actor_reference(xb, params))(x)

    assert out_pad.shape == (T, B, packed[1]["w_dim"])
    assert out.shape == (T, B, num_outputs)
    assert bool(jnp.all(out_pad[..., num_outputs:] == 0.0))   # padded lanes exactly zero
    assert jnp.allclose(out, ref, atol=2e-5, rtol=1e-4), float(jnp.max(jnp.abs(out - ref)))

    print("KERNEL_OK")
</pallas_src>

<mosaic_0001>
module attributes {stable_mosaic.version = 11 : i64} {
  func.func @actor_kernel(%arg0: i32, %arg1: memref<1x8x16xf32, #tpu.memory_space<vmem>>, %arg2: memref<280x128xf32, #tpu.memory_space<vmem>>, %arg3: memref<1x8x128xf32, #tpu.memory_space<vmem>>) attributes {dimension_semantics = [#tpu.dimension_semantics<parallel>], iteration_bounds = array<i64: 4>, scalar_prefetch = 0 : i64, scratch_operands = 0 : i64, tpu.core_type = #tpu.core_type<tc>, window_params = [{transform_indices = @transform_0, window_bounds = array<i64: 1, 8, 16>}, {pipeline_mode = #tpu.pipeline_mode<synchronous>, transform_indices = @transform_1, window_bounds = array<i64: 280, 128>}, {transform_indices = @transform_2, window_bounds = array<i64: 1, 8, 128>}]} {
    %c0 = arith.constant 0 : index
    %c0_0 = arith.constant 0 : index
    %c0_1 = arith.constant 0 : index
    %0 = vector.load %arg1[%c0, %c0_0, %c0_1] : memref<1x8x16xf32, #tpu.memory_space<vmem>>, vector<1x8x16xf32>
    %1 = vector.shape_cast %0 : vector<1x8x16xf32> to vector<8x16xf32>
    %c0_2 = arith.constant 0 : index
    %c0_3 = arith.constant 0 : index
    %2 = vector.load %arg2[%c0_2, %c0_3] : memref<280x128xf32, #tpu.memory_space<vmem>>, vector<16x128xf32>
    %c16 = arith.constant 16 : index
    %c0_4 = arith.constant 0 : index
    %3 = vector.load %arg2[%c16, %c0_4] : memref<280x128xf32, #tpu.memory_space<vmem>>, vector<128x128xf32>
    %c144 = arith.constant 144 : index
    %c0_5 = arith.constant 0 : index
    %4 = vector.load %arg2[%c144, %c0_5] : memref<280x128xf32, #tpu.memory_space<vmem>>, vector<128x128xf32>
    %c272 = arith.constant 272 : index
    %c0_6 = arith.constant 0 : index
    %5 = vector.load %arg2[%c272, %c0_6] : memref<280x128xf32, #tpu.memory_space<vmem>>, vector<1x128xf32>
    %c273 = arith.constant 273 : index
    %c0_7 = arith.constant 0 : index
    %6 = vector.load %arg2[%c273, %c0_7] : memref<280x128xf32, #tpu.memory_space<vmem>>, vector<1x128xf32>
    %c274 = arith.constant 274 : index
    %c0_8 = arith.constant 0 : index
    %7 = vector.load %arg2[%c274, %c0_8] : memref<280x128xf32, #tpu.memory_space<vmem>>, vector<1x128xf32>
    %c275 = arith.constant 275 : index
    %c0_9 = arith.constant 0 : index
    %8 = vector.load %arg2[%c275, %c0_9] : memref<280x128xf32, #tpu.memory_space<vmem>>, vector<1x128xf32>
    %c276 = arith.constant 276 : index
    %c0_10 = arith.constant 0 : index
    %9 = vector.load %arg2[%c276, %c0_10] : memref<280x128xf32, #tpu.memory_space<vmem>>, vector<1x128xf32>
    %cst = arith.constant dense<0.000000e+00> : vector<8x128xf32>
    %10 = tpu.matmul %1, %2, %cst {dimension_numbers = #tpu.dot_dimension_numbers<[1], [0], [0], [1], [0, 0, 1, 1], [], []>} : vector<8x16xf32>, vector<16x128xf32>, vector<8x128xf32> -> vector<8x128xf32>
    %cst_11 = arith.constant dense<0.000000e+00> : vector<128xf32>
    %11 = vector.multi_reduction <add>, %10, %cst_11 [0] : vector<8x128xf32> to vector<128xf32>
    %12 = vector.shape_cast %11 : vector<128xf32> to vector<1x128xf32>
    %cst_12 = arith.constant 1.250000e-01 : f32
    %13 = vector.broadcast %cst_12 : f32 to vector<1x128xf32>
    %14 = arith.mulf %12, %13 : vector<1x128xf32>
    %15 = arith.mulf %10, %10 : vector<8x128xf32>
    %cst_13 = arith.constant dense<0.000000e+00> : vector<128xf32>
    %16 = vector.multi_reduction <add>, %15, %cst_13 [0] : vector<8x128xf32> to vector<128xf32>
    %17 = vector.shape_cast %16 : vector<128xf32> to vector<1x128xf32>
    %cst_14 = arith.constant 1.250000e-01 : f32
    %18 = vector.broadcast %cst_14 : f32 to vector<1x128xf32>
    %19 = arith.mulf %17, %18 : vector<1x128xf32>
    %20 = arith.mulf %14, %14 : vector<1x128xf32>
    %21 = arith.subf %19, %20 : vector<1x128xf32>
    %cst_15 = arith.constant 0.000000e+00 : f32
    %22 = vector.broadcast %cst_15 : f32 to vector<1x128xf32>
    %23 = arith.maximumf %21, %22 : vector<1x128xf32>
    %cst_16 = arith.constant 9.99999974E-6 : f32
    %24 = vector.broadcast %cst_16 : f32 to vector<1x128xf32>
    %25 = arith.addf %23, %24 : vector<1x128xf32>
    %26 = math.rsqrt %25 : vector<1x128xf32>
    %27 = arith.mulf %5, %26 : vector<1x128xf32>
    %28 = arith.mulf %14, %27 : vector<1x128xf32>
    %29 = arith.subf %6, %28 : vector<1x128xf32>
    %30 = vector.broadcast %27 : vector<1x128xf32> to vector<8x128xf32>
    %31 = arith.mulf %10, %30 : vector<8x128xf32>
    %32 = vector.broadcast %29 : vector<1x128xf32> to vector<8x128xf32>
    %33 = arith.addf %31, %32 : vector<8x128xf32>
    %cst_17 = arith.constant 0.000000e+00 : f32
    %34 = vector.broadcast %cst_17 : f32 to vector<8x128xf32>
    %35 = arith.maximumf %33, %34 : vector<8x128xf32>
    %cst_18 = arith.constant dense<0.000000e+00> : vector<8x128xf32>
    %36 = tpu.matmul %35, %3, %cst_18 {dimension_numbers = #tpu.dot_dimension_numbers<[1], [0], [0], [1], [0, 0, 1, 1], [], []>} : vector<8x128xf32>, vector<128x128xf32>, vector<8x128xf32> -> vector<8x128xf32>
    %cst_19 = arith.constant dense<0.000000e+00> : vector<128xf32>
    %37 = vector.multi_reduction <add>, %36, %cst_19 [0] : vector<8x128xf32> to vector<128xf32>
    %38 = vector.shape_cast %37 : vector<128xf32> to vector<1x128xf32>
    %cst_20 = arith.constant 1.250000e-01 : f32
    %39 = vector.broadcast %cst_20 : f32 to vector<1x128xf32>
    %40 = arith.mulf %38, %39 : vector<1x128xf32>
    %41 = arith.mulf %36, %36 : vector<8x128xf32>
    %cst_21 = arith.constant dense<0.000000e+00> : vector<128xf32>
    %42 = vector.multi_reduction <add>, %41, %cst_21 [0] : vector<8x128xf32> to vector<128xf32>
    %43 = vector.shape_cast %42 : vector<128xf32> to vector<1x128xf32>
    %cst_22 = arith.constant 1.250000e-01 : f32
    %44 = vector.broadcast %cst_22 : f32 to vector<1x128xf32>
    %45 = arith.mulf %43, %44 : vector<1x128xf32>
    %46 = arith.mulf %40, %40 : vector<1x128xf32>
    %47 = arith.subf %45, %46 : vector<1x128xf32>
    %cst_23 = arith.constant 0.000000e+00 : f32
    %48 = vector.broadcast %cst_23 : f32 to vector<1x128xf32>
    %49 = arith.maximumf %47, %48 : vector<1x128xf32>
    %cst_24 = arith.constant 9.99999974E-6 : f32
    %50 = vector.broadcast %cst_24 : f32 to vector<1x128xf32>
    %51 = arith.addf %49, %50 : vector<1x128xf32>
    %52 = math.rsqrt %51 : vector<1x128xf32>
    %53 = arith.mulf %7, %52 : vector<1x128xf32>
    %54 = arith.mulf %40, %53 : vector<1x128xf32>
    %55 = arith.subf %8, %54 : vector<1x128xf32>
    %56 = vector.broadcast %53 : vector<1x128xf32> to vector<8x128xf32>
    %57 = arith.mulf %36, %56 : vector<8x128xf32>
    %58 = vector.broadcast %55 : vector<1x128xf32> to vector<8x128xf32>
    %59 = arith.addf %57, %58 : vector<8x128xf32>
    %cst_25 = arith.constant 0.000000e+00 : f32
    %60 = vector.broadcast %cst_25 : f32 to vector<8x128xf32>
    %61 = arith.maximumf %59, %60 : vector<8x128xf32>
    %cst_26 = arith.constant dense<0.000000e+00> : vector<8x128xf32>
    %62 = tpu.matmul %61, %4, %cst_26 {dimension_numbers = #tpu.dot_dimension_numbers<[1], [0], [0], [1], [0, 0, 1, 1], [], []>} : vector<8x128xf32>, vector<128x128xf32>, vector<8x128xf32> -> vector<8x128xf32>
    %63 = vector.broadcast %9 : vector<1x128xf32> to vector<8x128xf32>
    %64 = arith.addf %62, %63 : vector<8x128xf32>
    %65 = math.tanh %64 : vector<8x128xf32>
    %c0_27 = arith.constant 0 : index
    %c0_28 = arith.constant 0 : index
    %c0_29 = arith.constant 0 : index
    %66 = vector.load %arg3[%c0_27, %c0_28, %c0_29] : memref<1x8x128xf32, #tpu.memory_space<vmem>>, vector<1x8x128xf32>
    %67 = vector.shape_cast %66 : vector<1x8x128xf32> to vector<8x128xf32>
    %68 = vector.shape_cast %65 : vector<8x128xf32> to vector<1x8x128xf32>
    tpu.vector_store %arg3[%c0_27, %c0_28, %c0_29], %68 {strides = array<i32>} : memref<1x8x128xf32, #tpu.memory_space<vmem>>, vector<1x8x128xf32>,
    return
  }
  func.func @transform_0(%arg0: i32) -> (i32, i32, i32) {
    %c0_i32 = arith.constant 0 : i32
    %c0_i32_0 = arith.constant 0 : i32
    %c0_i32_1 = arith.constant 0 : i32
    return %arg0, %c0_i32, %c0_i32_0 : i32, i32, i32
  }
  func.func @transform_1(%arg0: i32) -> (i32, i32) {
    %c0_i32 = arith.constant 0 : i32
    %c0_i32_0 = arith.constant 0 : i32
    %c0_i32_1 = arith.constant 0 : i32
    return %c0_i32, %c0_i32_0 : i32, i32
  }
  func.func @transform_2(%arg0: i32) -> (i32, i32, i32) {
    %c0_i32 = arith.constant 0 : i32
    %c0_i32_0 = arith.constant 0 : i32
    %c0_i32_1 = arith.constant 0 : i32
    return %arg0, %c0_i32, %c0_i32_0 : i32, i32, i32
  }
}

</mosaic_0001>

<llo_original>
// kernel: tpu_custom_call.1
$region0: #{tpu_custom_call.1}
  #allocation0 [shape = 'u32[]', space=smem, size = 0x4, offset = 0x4, fixed_abs, tag = 'smem constant byte address 0x4 - core index']
  #allocation1 [shape = 'u32[72,128]{1,0:T(1,128)}', space=vmem, size = 0x9000, scoped, tag = 'internal scratch']
  %s0 = inlined_call_operand.hbm [shape: f32[4,8,16], index: 0, kind: input, shape index: {}]
  %s1 = inlined_call_operand.hbm [shape: f32[280,128], index: 1, kind: input, shape index: {}]
  %s2 = inlined_call_operand.hbm [shape: f32[4,8,128], index: 2, kind: output, shape index: {}]
  %s3 = sld [smem:[#allocation0]]
  $region49: #{tpu_custom_call.1} parent=0
    _
  %s5 = ssub.s32 1, %s3
  %s6 = scalar_select 0, %s5, %s3
  $region1: #{tpu_custom_call.1} parent=0
    #allocation2 [shape = 'u8[8192]{0}', space=vmem, size = 0x2000, scoped, tag = 'input window, operand 0']
    #allocation3 [shape = 's32[2]{0}', space=sflag, size = 0x8, scoped, tag = 'scoped memory for tpu_custom_call.1']
    #allocation4 [shape = 's32[2]{0}', space=sflag, size = 0x8, scoped, tag = 'scoped memory for tpu_custom_call.1']
    #allocation5 [shape = 'u8[143360]{0}', space=vmem, size = 0x23000, scoped, tag = 'input window, operand 1, single buffered']
    #allocation6 [shape = 's32[1]{0}', space=sflag, size = 0x4, scoped, tag = 'scoped memory for tpu_custom_call.1']
    #allocation7 [shape = 'u8[8192]{0}', space=vmem, size = 0x2000, scoped, tag = 'output window, operand 0']
    %7 = vsyncpa [#allocation3], 0
    %s8 = scalar_lea.sflag [#allocation3], 1
    %9 = vsyncpa %s8, 0
    %10 = vsyncpa [#allocation6], 0
    %11 = vsyncpa [#allocation4], 0
    %s12 = scalar_lea.sflag [#allocation4], 1
    %13 = vsyncpa %s12, 0
    loop: start=0, step=1, limit=6
    $region2: #{tpu_custom_call.1} parent=1 // loop_pre_header
      _
    $region3: #{tpu_custom_call.1} parent=1 // loop_header
      %s15 = sphi 0, %s19
      %p16 = scmp.ge.s32.totalorder %s15, 6
      %s25 = sphi 0, %s27
      %s28 = sphi 0, %s25
      %s29 = sphi 0, %s28
      %s45 = sphi 0, %s29
      %s49 = sphi 0, %s49
      %s51 = sphi 0, %s49
      %s52 = sphi 0, %s51
      %s66 = sphi 0, %s52
      %s72 = sphi 0, %s74
      %s75 = sphi 0, %s72
      %s76 = sphi 0, %s75
      %s92 = sphi 0, %s76
    $region4: #{tpu_custom_call.1} parent=1 // loop_header_branch
      %18 = sbr.rel (%p16) target = $region8
    $region5: #{tpu_custom_call.1} parent=1 // loop_body
      %s20 = ssub.s32 %s15, 1
      %s21 = ssub.s32 %s15, 2
      %s22 = sadd.s32 %s15, 1
      %s23 = ssub.s32 %s15, %s22
      %p24 = scmp.eq.s32.totalorder %s23, 0
      %s26 = sadd.s32 %s25, 1
      %s27 = scalar_select %p24, %s25, %s26
      %p30 = pneg %p24
      %p31 = scmp.eq.s32.totalorder %s15, 3
      %p32 = por %p30, %p31
      %p33 = scmp.ne.s32.totalorder %s25, %s28
      %p34 = scmp.eq.s32.totalorder %s15, 0
      %p35 = por %p33, %p34
      %p36 = scmp.ne.s32.totalorder %s25, %s28
      %p37 = scmp.eq.s32.totalorder %s20, 3
      %p38 = por %p36, %p37
      %p39 = scmp.ne.s32.totalorder %s28, %s29
      %p40 = scmp.eq.s32.totalorder %s20, 0
      %p41 = por %p39, %p40
      %p42 = scmp.ne.s32.totalorder %s28, %s29
      %p43 = scmp.eq.s32.totalorder %s21, 3
      %p44 = por %p42, %p43
      %p46 = scmp.ne.s32.totalorder %s29, %s45
      %p47 = scmp.eq.s32.totalorder %s21, 0
      %p48 = por %p46, %p47
      %s50 = sadd.s32 %s49, 1
      %p53 = scmp.eq.s32.totalorder %s15, 3
      %p54 = scmp.ne.s32.totalorder %s49, %s51
      %p55 = scmp.eq.s32.totalorder %s15, 0
      %p56 = por %p54, %p55
      %p57 = scmp.ne.s32.totalorder %s49, %s51
      %p58 = scmp.eq.s32.totalorder %s20, 3
      %p59 = por %p57, %p58
      %p60 = scmp.ne.s32.totalorder %s51, %s52
      %p61 = scmp.eq.s32.totalorder %s20, 0
      %p62 = por %p60, %p61
      %p63 = scmp.ne.s32.totalorder %s51, %s52
      %p64 = scmp.eq.s32.totalorder %s21, 3
      %p65 = por %p63, %p64
      %p67 = scmp.ne.s32.totalorder %s52, %s66
      %p68 = scmp.eq.s32.totalorder %s21, 0
      %p69 = por %p67, %p68
      %s70 = ssub.s32 %s15, %s22
      %p71 = scmp.eq.s32.totalorder %s70, 0
      %s73 = sadd.s32 %s72, 1
      %s74 = scalar_select %p71, %s72, %s73
      %p77 = pneg %p71
      %p78 = scmp.eq.s32.totalorder %s15, 3
      %p79 = por %p77, %p78
      %p80 = scmp.ne.s32.totalorder %s72, %s75
      %p81 = scmp.eq.s32.totalorder %s15, 0
      %p82 = por %p80, %p81
      %p83 = scmp.ne.s32.totalorder %s72, %s75
      %p84 = scmp.eq.s32.totalorder %s20, 3
      %p85 = por %p83, %p84
      %p86 = scmp.ne.s32.totalorder %s75, %s76
      %p87 = scmp.eq.s32.totalorder %s20, 0
      %p88 = por %p86, %p87
      %p89 = scmp.ne.s32.totalorder %s75, %s76
      %p90 = scmp.eq.s32.totalorder %s21, 3
      %p91 = por %p89, %p90
      %p93 = scmp.ne.s32.totalorder %s76, %s92
      %p94 = scmp.eq.s32.totalorder %s21, 0
      %p95 = por %p93, %p94
      %p96 = scmp.le.s32.totalorder 1, %s15
      %p97 = scmp.lt.s32.totalorder %s15, 5
      %p98 = pnand %p96, %p97
      %p99 = pneg %p98
      // Predicated region
      $region9: #{tpu_custom_call.1} parent=5 // pred_check
        _
      $region10: #{tpu_custom_call.1} parent=5 // pred_check_branch
        %101 = sbr.rel (%p98) target = $region12
      $region11: #{tpu_custom_call.1} parent=5 // pred_region
        %s102 = ssub.s32 %s15, 1
        // Predicated region
        $region13: #{tpu_custom_call.1} parent=11 // pred_check
          %p103 = pneg %p62
        $region14: #{tpu_custom_call.1} parent=11 // pred_check_branch
          %105 = sbr.rel (%p103) target = $region16
        $region15: #{tpu_custom_call.1} parent=11 // pred_region
          %107 = vsyncadd [#allocation6], 0
          %s108 = sshll.u32 %s1, 4
          %s109 = int_to_ptr.hbm [resolvable:$true] %s108
          %s110 = sshll.u32 [#allocation5], 4
          %s111 = int_to_ptr.vmem [resolvable:$true] %s110
          %116 = dma.hbm_to_vmem [thread:$0]  %s109, 4480, %s111, [#allocation6], 128, 128, 8
        $region16: #{tpu_custom_call.1} parent=11 // pred_fallthru
          _
      $region12: #{tpu_custom_call.1} parent=5 // pred_fallthru
        _
      %p117 = scmp.lt.s32.totalorder %s15, 4
      // Predicated region
      $region17: #{tpu_custom_call.1} parent=5 // pred_check
        %p118 = pneg %p117
      $region18: #{tpu_custom_call.1} parent=5 // pred_check_branch
        %120 = sbr.rel (%p118) target = $region20
      $region19: #{tpu_custom_call.1} parent=5 // pred_region
        // Predicated region
        $region21: #{tpu_custom_call.1} parent=19 // pred_check
          %p121 = pneg %p35
        $region22: #{tpu_custom_call.1} parent=19 // pred_check_branch
          %123 = sbr.rel (%p121) target = $region24
        $region23: #{tpu_custom_call.1} parent=19 // pred_region
          %s124 = sand.u32 %s25, 1
          %s125 = scalar_lea.sflag [#allocation3], %s124
          %s126 = sand.u32 %s25, 1
          %s127 = smul.addr %s126, 8
          %s128 = scalar_lea.vmem [#allocation2], %s127
          %130 = vsyncadd %s125, 0
          %s131 = smul.addr %s15, 8
          %s132 = scalar_lea.hbm %s0, %s131
          %s134 = sshll.u32 %s132, 4
          %s135 = int_to_ptr.hbm [resolvable:$true] %s134
          %s136 = sshll.u32 %s128, 4
          %s137 = int_to_ptr.vmem [resolvable:$true] %s136
          %139 = dma.hbm_to_vmem [thread:$0]  %s135, 128, %s137, %s125
        $region24: #{tpu_custom_call.1} parent=19 // pred_fallthru
          _
      $region20: #{tpu_custom_call.1} parent=5 // pred_fallthru
        _
      %p140 = scmp.le.s32.totalorder 1, %s15
      %p141 = scmp.lt.s32.totalorder %s15, 5
      %p142 = pnand %p140, %p141
      %p143 = pneg %p142
      // Predicated region
      $region25: #{tpu_custom_call.1} parent=5 // pred_check
        _
      $region26: #{tpu_custom_call.1} parent=5 // pred_check_branch
        %145 = sbr.rel (%p142) target = $region28
      $region27: #{tpu_custom_call.1} parent=5 // pred_region
        %s146 = ssub.s32 %s15, 1
        %s147 = sand.u32 %s28, 1
        %s148 = scalar_lea.sflag [#allocation3], %s147
        %s149 = sand.u32 %s28, 1
        %s150 = smul.addr %s149, 8
        %s151 = scalar_lea.vmem [#allocation2], %s150
        // Predicated region
        $region29: #{tpu_custom_call.1} parent=27 // pred_check
          %p152 = pneg %p41
        $region30: #{tpu_custom_call.1} parent=27 // pred_check_branch
          %154 = sbr.rel (%p152) target = $region32
        $region31: #{tpu_custom_call.1} parent=27 // pred_region
          %156 = dma.done %s148, 128
        $region32: #{tpu_custom_call.1} parent=27 // pred_fallthru
          _
        // Predicated region
        $region33: #{tpu_custom_call.1} parent=27 // pred_check
          %p157 = pneg %p62
        $region34: #{tpu_custom_call.1} parent=27 // pred_check_branch
          %159 = sbr.rel (%p157) target = $region36
        $region35: #{tpu_custom_call.1} parent=27 // pred_region
          %161 = dma.done [#allocation6], 4480
        $region36: #{tpu_custom_call.1} parent=27 // pred_fallthru
          _
        %s162 = sand.u32 %s28, 1
        %s163 = scalar_lea.sflag [#allocation3], %s162
        %s164 = sand.u32 %s28, 1
        %s165 = smul.addr %s164, 8
        %s166 = scalar_lea.vmem [#allocation2], %s165
        %p167 = pneg %p41
        %p168 = pneg %p38
        %p169 = pneg %p62
        %p170 = pneg %p59
        %p171 = pneg %p88
        %p172 = pneg %p85
        %s173 = sand.u32 %s75, 1
        %s174 = scalar_lea.sflag [#allocation4], %s173
        %s175 = sand.u32 %s75, 1
        %s176 = smul.addr %s175, 8
        %s177 = scalar_lea.vmem [#allocation7], %s176
        %v178 = vld [vmem:[%s151] sm:$0xff]
        %v179 = vld [vmem:[#allocation5] sm:$0xff]
        %v180 = vld [vmem:[#allocation5 + $0x8] sm:$0xff]
        %v181 = vld [vmem:[#allocation5 + $0x10] sm:$0xff]
        %v182 = vld [vmem:[#allocation5 + $0x18] sm:$0xff]
        %v183 = vld [vmem:[#allocation5 + $0x20] sm:$0xff]
        %v184 = vld [vmem:[#allocation5 + $0x28] sm:$0xff]
        %v185 = vld [vmem:[#allocation5 + $0x30] sm:$0xff]
        %v186 = vld [vmem:[#allocation5 + $0x38] sm:$0xff]
        %v187 = vld [vmem:[#allocation5 + $0x40] sm:$0xff]
        %v188 = vld [vmem:[#allocation5 + $0x48] sm:$0xff]
        %v189 = vld [vmem:[#allocation5 + $0x50] sm:$0xff]
        %v190 = vld [vmem:[#allocation5 + $0x58] sm:$0xff]
        %v191 = vld [vmem:[#allocation5 + $0x60] sm:$0xff]
        %v192 = vld [vmem:[#allocation5 + $0x68] sm:$0xff]
        %v193 = vld [vmem:[#allocation5 + $0x70] sm:$0xff]
        %v194 = vld [vmem:[#allocation5 + $0x78] sm:$0xff]
        %v195 = vld [vmem:[#allocation5 + $0x80] sm:$0xff]
        %v196 = vld [vmem:[#allocation5 + $0x88] sm:$0xff]
        %v197 = vld [vmem:[#allocation5 + $0x90] sm:$0xff]
        %v198 = vld [vmem:[#allocation5 + $0x98] sm:$0xff]
        %v199 = vld [vmem:[#allocation5 + $0xa0] sm:$0xff]
        %v200 = vld [vmem:[#allocation5 + $0xa8] sm:$0xff]
        %v201 = vld [vmem:[#allocation5 + $0xb0] sm:$0xff]
        %v202 = vld [vmem:[#allocation5 + $0xb8] sm:$0xff]
        %v203 = vld [vmem:[#allocation5 + $0xc0] sm:$0xff]
        %v204 = vld [vmem:[#allocation5 + $0xc8] sm:$0xff]
        %v205 = vld [vmem:[#allocation5 + $0xd0] sm:$0xff]
        %v206 = vld [vmem:[#allocation5 + $0xd8] sm:$0xff]
        %v207 = vld [vmem:[#allocation5 + $0xe0] sm:$0xff]
        %v208 = vld [vmem:[#allocation5 + $0xe8] sm:$0xff]
        %v209 = vld [vmem:[#allocation5 + $0xf0] sm:$0xff]
        %v210 = vld [vmem:[#allocation5 + $0xf8] sm:$0xff]
        %v211 = vld [vmem:[#allocation5 + $0x100] sm:$0xff]
        %v212 = vld [vmem:[#allocation5 + $0x108] sm:$0xff]
        %v213 = vld [vmem:[#allocation5 + $0x110] sm:$0x1]
        %v214 = vld [vmem:[#allocation5 + $0x111] sm:$0x1]
        %v215 = vld [vmem:[#allocation5 + $0x112] sm:$0x1]
        %v216 = vld [vmem:[#allocation5 + $0x113] sm:$0x1]
        %v217 = vld [vmem:[#allocation5 + $0x114] sm:$0x1]
        %vm218 = vcmask 130048
        %v220 = vsel %vm218, %v178, 0
        %222 = vmatpush.msra.mxu0 0.0
        %223 = vmatpush.msra.mxu0 0.0
        %224 = vmatpush.msra.mxu0 0.0
        %225 = vmatpush.msra.mxu0 0.0
        %226 = vmatpush.msra.mxu0 0.0
        %227 = vmatpush.msra.mxu0 0.0
        %228 = vmatpush.msra.mxu0 0.0
        %229 = vmatpush.msra.mxu0 0.0
        %230 = vmatpush.msra.mxu0 0.0
        %231 = vmatpush.msra.mxu0 0.0
        %232 = vmatpush.msra.mxu0 0.0
        %233 = vmatpush.msra.mxu0 0.0
        %234 = vmatpush.msra.mxu0 0.0
        %235 = vmatpush.msra.mxu0 0.0
        %236 = vmatpush.msra.mxu0 %v180
        %237 = vmatpush.msra.mxu0 %v179
        %238 = vmatmul.f32.gmra.mxu0 %v220
        %v239 = vpop.f32.mrf.mxu0
        %v240 = vadd.f32 0.0, %v239
        %241 = vdwg.mxu0
        %v242 = vrot.slane %v240, 4
        %v243 = vadd.f32 %v240, %v242
        %v244 = vrot.slane %v243, 2
        %v245 = vadd.f32 %v243, %v244
        %v246 = vrot.slane %v245, 1
        %v247 = vadd.f32 %v245, %v246
        %v248 = vmul.f32 %v247, 0.125
        %v249 = vmul.f32 %v240, %v240
        %v250 = vrot.slane %v249, 4
        %v251 = vadd.f32 %v249, %v250
        %v252 = vrot.slane %v251, 2
        %v253 = vadd.f32 %v251, %v252
        %v254 = vrot.slane %v253, 1
        %v255 = vadd.f32 %v253, %v254
        %v256 = vmul.f32 %v255, 0.125
        %v257 = vmul.f32 %v248, %v248
        %v258 = vsub.f32 %v256, %v257
        %v259 = vmax.f32 %v258, 0.0
        %v260 = vadd.f32 %v259, 1e-05
        %v261 = vrsqrt.pop %v260
        %v262 = vmul.f32 %v261, %v260
        %v263 = vmul.f32 %v262, %v261
        %v264 = vmul.f32 0.5, %v263
        %v265 = vsub.f32 1.5, %v264
        %v266 = vmul.f32 %v261, %v265
        %vm267 = vweird.f32 %v260
        %vm268 = vweird.f32 %v261
        %vm269 = vmor %vm267, %vm268
        %v270 = vsel %vm269, %v261, %v266
        %v271 = vmul.f32 %v213, %v270
        %v272 = vmul.f32 %v248, %v271
        %v273 = vsub.f32 %v214, %v272
        %v274 = vperm.slane %v271, 0
        %v275 = vmul.f32 %v240, %v274
        %v276 = vperm.slane %v273, 0
        %v277 = vadd.f32 %v275, %v276
        %v278 = vmax.f32 %v277, 0.0
        %279 = vmatpush.msra.mxu0 %v196
        %280 = vmatpush.msra.mxu0 %v195
        %281 = vmatpush.msra.mxu0 %v194
        %282 = vmatpush.msra.mxu0 %v193
        %283 = vmatpush.msra.mxu0 %v192
        %284 = vmatpush.msra.mxu0 %v191
        %285 = vmatpush.msra.mxu0 %v190
        %286 = vmatpush.msra.mxu0 %v189
        %287 = vmatpush.msra.mxu0 %v188
        %288 = vmatpush.msra.mxu0 %v187
        %289 = vmatpush.msra.mxu0 %v186
        %290 = vmatpush.msra.mxu0 %v185
        %291 = vmatpush.msra.mxu0 %v184
        %292 = vmatpush.msra.mxu0 %v183
        %293 = vmatpush.msra.mxu0 %v182
        %294 = vmatpush.msra.mxu0 %v181
        %295 = vmatmul.f32.gmra.mxu0 %v278
        %v296 = vpop.f32.mrf.mxu0
        %v297 = vadd.f32 0.0, %v296
        %298 = vdwg.mxu0
        %v299 = vrot.slane %v297, 4
        %v300 = vadd.f32 %v297, %v299
        %v301 = vrot.slane %v300, 2
        %v302 = vadd.f32 %v300, %v301
        %v303 = vrot.slane %v302, 1
        %v304 = vadd.f32 %v302, %v303
        %v305 = vmul.f32 %v304, 0.125
        %v306 = vmul.f32 %v297, %v297
        %v307 = vrot.slane %v306, 4
        %v308 = vadd.f32 %v306, %v307
        %v309 = vrot.slane %v308, 2
        %v310 = vadd.f32 %v308, %v309
        %v311 = vrot.slane %v310, 1
        %v312 = vadd.f32 %v310, %v311
        %v313 = vmul.f32 %v312, 0.125
        %v314 = vmul.f32 %v305, %v305
        %v315 = vsub.f32 %v313, %v314
        %v316 = vmax.f32 %v315, 0.0
        %v317 = vadd.f32 %v316, 1e-05
        %v318 = vrsqrt.pop %v317
        %v319 = vmul.f32 %v318, %v317
        %v320 = vmul.f32 %v319, %v318
        %v321 = vmul.f32 0.5, %v320
        %v322 = vsub.f32 1.5, %v321
        %v323 = vmul.f32 %v318, %v322
        %vm324 = vweird.f32 %v317
        %vm325 = vweird.f32 %v318
        %vm326 = vmor %vm324, %vm325
        %v327 = vsel %vm326, %v318, %v323
        %v328 = vmul.f32 %v215, %v327
        %v329 = vmul.f32 %v305, %v328
        %v330 = vsub.f32 %v216, %v329
        %v331 = vperm.slane %v328, 0
        %v332 = vmul.f32 %v297, %v331
        %v333 = vperm.slane %v330, 0
        %v334 = vadd.f32 %v332, %v333
        %v335 = vmax.f32 %v334, 0.0
        %v336 = vperm.slane %v217, 0
        %337 = vmatpush.msra.mxu0 %v212
        %338 = vmatpush.msra.mxu0 %v211
        %339 = vmatpush.msra.mxu0 %v210
        %340 = vmatpush.msra.mxu0 %v209
        %341 = vmatpush.msra.mxu0 %v208
        %342 = vmatpush.msra.mxu0 %v207
        %343 = vmatpush.msra.mxu0 %v206
        %344 = vmatpush.msra.mxu0 %v205
        %345 = vmatpush.msra.mxu0 %v204
        %346 = vmatpush.msra.mxu0 %v203
        %347 = vmatpush.msra.mxu0 %v202
        %348 = vmatpush.msra.mxu0 %v201
        %349 = vmatpush.msra.mxu0 %v200
        %350 = vmatpush.msra.mxu0 %v199
        %351 = vmatpush.msra.mxu0 %v198
        %352 = vmatpush.msra.mxu0 %v197
        %353 = vmatmul.f32.gmra.mxu0 %v335
        %v354 = vpop.f32.mrf.mxu0
        %v355 = vadd.f32 %v336, %v354
        %356 = vdwg.mxu0
        %v357 = vtanh.pop %v355
        %358 = vst [vmem:[%s177] sm:$0xff] %v357
        %s359 = sand.u32 %s75, 1
        %s360 = scalar_lea.sflag [#allocation4], %s359
        %s361 = sand.u32 %s75, 1
        %s362 = smul.addr %s361, 8
        %s363 = scalar_lea.vmem [#allocation7], %s362
        // Predicated region
        $region37: #{tpu_custom_call.1} parent=27 // pred_check
          %p364 = pneg %p85
        $region38: #{tpu_custom_call.1} parent=27 // pred_check_branch
          %366 = sbr.rel (%p364) target = $region40
        $region39: #{tpu_custom_call.1} parent=27 // pred_region
          %368 = vsyncadd %s360, 0
          %s369 = smul.addr %s20, 8
          %s370 = scalar_lea.hbm %s2, %s369
          %s372 = sshll.u32 %s363, 4
          %s373 = int_to_ptr.vmem [resolvable:$true] %s372
          %s374 = sshll.u32 %s370, 4
          %s375 = int_to_ptr.hbm [resolvable:$true] %s374
          %377 = dma.vmem_to_hbm [thread:$0]  %s373, 128, %s375, %s360
        $region40: #{tpu_custom_call.1} parent=27 // pred_fallthru
          _
      $region28: #{tpu_custom_call.1} parent=5 // pred_fallthru
        _
      %p378 = scmp.le.s32.totalorder 2, %s15
      // Predicated region
      $region41: #{tpu_custom_call.1} parent=5 // pred_check
        %p379 = pneg %p378
      $region42: #{tpu_custom_call.1} parent=5 // pred_check_branch
        %381 = sbr.rel (%p379) target = $region44
      $region43: #{tpu_custom_call.1} parent=5 // pred_region
        %s382 = ssub.s32 %s15, 2
        // Predicated region
        $region45: #{tpu_custom_call.1} parent=43 // pred_check
          %p383 = pneg %p91
        $region46: #{tpu_custom_call.1} parent=43 // pred_check_branch
          %385 = sbr.rel (%p383) target = $region48
        $region47: #{tpu_custom_call.1} parent=43 // pred_region
          %s386 = sand.u32 %s76, 1
          %s387 = scalar_lea.sflag [#allocation4], %s386
          %s388 = sand.u32 %s76, 1
          %s389 = smul.addr %s388, 8
          %s390 = scalar_lea.vmem [#allocation7], %s389
          %392 = dma.done %s387, 128
        $region48: #{tpu_custom_call.1} parent=43 // pred_fallthru
          _
      $region44: #{tpu_custom_call.1} parent=5 // pred_fallthru
        _
    $region6: #{tpu_custom_call.1} parent=1 // loop_footer
      %s19 = sadd.s32 1, %s15
    $region7: #{tpu_custom_call.1} parent=1 // loop_footer_branch
      %14 = sbr.rel target = $region3
    $region8: #{tpu_custom_call.1} parent=1 // loop_exit
      _
    %393 = vsyncpa [#allocation3], 1
    %s394 = scalar_lea.sflag [#allocation3], 1
    %395 = vsyncpa %s394, 1
    %396 = vsyncpa [#allocation6], 1
    %397 = vsyncpa [#allocation4], 1
    %s398 = scalar_lea.sflag [#allocation4], 1
    %399 = vsyncpa %s398, 1

</llo_original>
